<compile_context>
chip_gen: v5e
topology: v5e:2x2
jax: 0.10.0
libtpu: 0.0.40
codegen_flags: <defaults>
</compile_context>

<pallas_src>
import functools

import jax
import jax.numpy as jnp
from jax.experimental import pallas as pl
from jax.experimental.pallas import tpu as pltpu


def _round_up(x, m):
    return (x + m - 1) // m * m


def mlp_kernel(x_ref, w1_ref, b1_ref, w2_ref, b2_ref, w3_ref, b3_ref, o_ref,
               *, in_dim, use_vpu_layer1):
    # ---- Layer 1: Linear(in_dim -> hid_p) + ReLU ----
    if use_vpu_layer1:
        # K is tiny (e.g. 2): an MXU pass would be ~empty, so layer 1 is a few
        # broadcasted VPU multiply-adds in f32.
        x = x_ref[...].astype(jnp.float32)               # (tb, in_dim)
        w1 = w1_ref[...].astype(jnp.float32)              # (in_dim, hid_p)
        h1 = b1_ref[...]                                   # (1, hid_p), broadcasts
        for i in range(in_dim):                            # static, tiny trip count
            h1 = h1 + x[:, i:i + 1] * w1[i:i + 1, :]
    else:
        h1 = jnp.dot(x_ref[...].astype(w1_ref.dtype), w1_ref[...],
                     preferred_element_type=jnp.float32) + b1_ref[...]
    h1 = jnp.maximum(h1, 0.0)

    # ---- Layer 2: Linear(hid_p -> hid_p) + ReLU (MXU, bf16 in / f32 acc) ----
    h2 = jnp.dot(h1.astype(w2_ref.dtype), w2_ref[...],
                 preferred_element_type=jnp.float32) + b2_ref[...]
    h2 = jnp.maximum(h2, 0.0)

    # ---- Layer 3: Linear(hid_p -> out_p), no activation ----
    y = jnp.dot(h2.astype(w3_ref.dtype), w3_ref[...],
                preferred_element_type=jnp.float32) + b3_ref[...]
    o_ref[...] = y.astype(o_ref.dtype)


def _pad2(a, shape, dtype):
    pr = shape[0] - a.shape[0]
    pc = shape[1] - a.shape[1]
    return jnp.pad(a, ((0, pr), (0, pc))).astype(dtype)


def _vmem_bytes_estimate(batch_tile, in_dim, hid_p, out_p, w_itemsize):
    io_tiles = 2 * batch_tile * in_dim * 4 + 2 * batch_tile * out_p * 4  # dbl-buffered x / out
    weights = 2 * w_itemsize * (in_dim * hid_p + hid_p * hid_p + hid_p * out_p)
    biases = 2 * 4 * (2 * hid_p + out_p)
    interm = 3 * batch_tile * hid_p * 4                                  # h1/h2/acc f32
    return io_tiles + weights + biases + interm


def mlp_forward(x, params, *, batch_tile=None, max_batch_tile=512,
                weight_dtype=jnp.bfloat16):
    """x: (B, input_dim) float32. params: dict of (in, out)-layout weights/biases."""
    w1, b1, w2, b2, w3, b3 = (params[k] for k in ("w1", "b1", "w2", "b2", "w3", "b3"))
    B, in_dim = x.shape
    hid = w1.shape[1]
    out_dim = w3.shape[1]

    # Lane-dense (multiples of 128) hidden / output dims.
    hid_p = _round_up(hid, 128)
    out_p = _round_up(out_dim, 128)

    # Big batch tile (multiple of 8, capped); pad batch to a tile multiple.
    if batch_tile is None:
        batch_tile = min(max_batch_tile, _round_up(B, 8))
    batch_tile = max(8, _round_up(batch_tile, 8))
    B_p = _round_up(B, batch_tile)
    grid = (B_p // batch_tile,)

    x_p = jnp.pad(x, ((0, B_p - B), (0, 0)))

    w1_p = _pad2(w1, (in_dim, hid_p), weight_dtype)
    b1_p = _pad2(b1, (1, hid_p), jnp.float32)
    w2_p = _pad2(w2, (hid_p, hid_p), weight_dtype)
    b2_p = _pad2(b2, (1, hid_p), jnp.float32)
    w3_p = _pad2(w3, (hid_p, out_p), weight_dtype)
    b3_p = _pad2(b3, (1, out_p), jnp.float32)

    est = _vmem_bytes_estimate(batch_tile, in_dim, hid_p, out_p,
                               jnp.dtype(weight_dtype).itemsize)
    vmem_limit = max(32 << 20, min(int(1.5 * est) + (4 << 20), 96 << 20))

    kernel = functools.partial(mlp_kernel, in_dim=in_dim,
                               use_vpu_layer1=(in_dim <= 8))

    out_arr = pl.pallas_call(
        kernel,
        out_shape=jax.ShapeDtypeStruct((B_p, out_p), jnp.float32),
        grid_spec=pltpu.PrefetchScalarGridSpec(
            num_scalar_prefetch=0,
            grid=grid,
            in_specs=[
                pl.BlockSpec((batch_tile, in_dim), lambda i: (i, 0)),   # x tile
                pl.BlockSpec((in_dim, hid_p), lambda i: (0, 0)),        # w1
                pl.BlockSpec((1, hid_p), lambda i: (0, 0)),             # b1
                pl.BlockSpec((hid_p, hid_p), lambda i: (0, 0)),         # w2
                pl.BlockSpec((1, hid_p), lambda i: (0, 0)),             # b2
                pl.BlockSpec((hid_p, out_p), lambda i: (0, 0)),         # w3
                pl.BlockSpec((1, out_p), lambda i: (0, 0)),             # b3
            ],
            out_specs=pl.BlockSpec((batch_tile, out_p), lambda i: (i, 0)),
        ),
        compiler_params=pltpu.CompilerParams(
            dimension_semantics=("parallel",),   # batch axis shards across TCs
            vmem_limit_bytes=vmem_limit,
        ),
    )(x_p, w1_p, b1_p, w2_p, b2_p, w3_p, b3_p)

    return out_arr[:B, :out_dim]


def init_params(key, input_dim=2, hidden_dim=64, output_dim=1):
    """Deterministic init mimicking PyTorch Linear default U[-1/sqrt(fan_in), +]."""
    ks = jax.random.split(key, 6)

    def uni(k, shape, fan_in):
        bound = 1.0 / jnp.sqrt(fan_in)
        return jax.random.uniform(k, shape, jnp.float32, -bound, bound)

    # Stored already transposed: (in, out) so kernel does x @ W.
    return {
        "w1": uni(ks[0], (input_dim, hidden_dim), input_dim),
        "b1": uni(ks[1], (1, hidden_dim), input_dim),
        "w2": uni(ks[2], (hidden_dim, hidden_dim), hidden_dim),
        "b2": uni(ks[3], (1, hidden_dim), hidden_dim),
        "w3": uni(ks[4], (hidden_dim, output_dim), hidden_dim),
        "b3": uni(ks[5], (1, output_dim), hidden_dim),
    }


def mlp_reference(x, params, weight_dtype=jnp.bfloat16):
    """Reference using the same bf16-quantized weights/activations as the kernel."""
    f32 = jnp.float32
    q = lambda a: a.astype(weight_dtype).astype(f32)
    h1 = jnp.maximum(x @ q(params["w1"]) + params["b1"], 0.0)
    h1 = q(h1)   # kernel feeds bf16 activations to the MXU for layer 2
    h2 = jnp.maximum(h1 @ q(params["w2"]) + params["b2"], 0.0)
    h2 = q(h2)
    return h2 @ q(params["w3"]) + params["b3"]


if __name__ == "__main__":
    key = jax.random.PRNGKey(0)
    k_params, k_x = jax.random.split(key)

    input_dim, hidden_dim, output_dim = 2, 64, 1
    batch = 8

    params = init_params(k_params, input_dim, hidden_dim, output_dim)
    x = jax.random.normal(k_x, (batch, input_dim), jnp.float32)

    out = mlp_forward(x, params)
    out = jax.block_until_ready(out)

    ref = mlp_reference(x, params)
    assert out.shape == (batch, output_dim)
    assert jnp.allclose(out, ref, atol=1e-3, rtol=1e-3), "mismatch vs reference"

    print("KERNEL_OK")
</pallas_src>

<mosaic_0001>
module attributes {stable_mosaic.version = 11 : i64} {
  func.func @mlp_kernel(%arg0: i32, %arg1: memref<8x2xf32, #tpu.memory_space<vmem>>, %arg2: memref<2x128xbf16, #tpu.memory_space<vmem>>, %arg3: memref<1x128xf32, #tpu.memory_space<vmem>>, %arg4: memref<128x128xbf16, #tpu.memory_space<vmem>>, %arg5: memref<1x128xf32, #tpu.memory_space<vmem>>, %arg6: memref<128x128xbf16, #tpu.memory_space<vmem>>, %arg7: memref<1x128xf32, #tpu.memory_space<vmem>>, %arg8: memref<8x128xf32, #tpu.memory_space<vmem>>) attributes {dimension_semantics = [#tpu.dimension_semantics<parallel>], iteration_bounds = array<i64: 1>, scalar_prefetch = 0 : i64, scratch_operands = 0 : i64, tpu.core_type = #tpu.core_type<tc>, window_params = [{transform_indices = @transform_0, window_bounds = array<i64: 8, 2>}, {pipeline_mode = #tpu.pipeline_mode<synchronous>, transform_indices = @transform_1, window_bounds = array<i64: 2, 128>}, {pipeline_mode = #tpu.pipeline_mode<synchronous>, transform_indices = @transform_2, window_bounds = array<i64: 1, 128>}, {pipeline_mode = #tpu.pipeline_mode<synchronous>, transform_indices = @transform_3, window_bounds = array<i64: 128, 128>}, {pipeline_mode = #tpu.pipeline_mode<synchronous>, transform_indices = @transform_4, window_bounds = array<i64: 1, 128>}, {pipeline_mode = #tpu.pipeline_mode<synchronous>, transform_indices = @transform_5, window_bounds = array<i64: 128, 128>}, {pipeline_mode = #tpu.pipeline_mode<synchronous>, transform_indices = @transform_6, window_bounds = array<i64: 1, 128>}, {transform_indices = @transform_7, window_bounds = array<i64: 8, 128>}]} {
    %c0 = arith.constant 0 : index
    %c0_0 = arith.constant 0 : index
    %0 = vector.load %arg1[%c0, %c0_0] : memref<8x2xf32, #tpu.memory_space<vmem>>, vector<8x2xf32>
    %c0_1 = arith.constant 0 : index
    %c0_2 = arith.constant 0 : index
    %1 = vector.load %arg2[%c0_1, %c0_2] : memref<2x128xbf16, #tpu.memory_space<vmem>>, vector<2x128xbf16>
    %2 = arith.extf %1 : vector<2x128xbf16> to vector<2x128xf32>
    %c0_3 = arith.constant 0 : index
    %c0_4 = arith.constant 0 : index
    %3 = vector.load %arg3[%c0_3, %c0_4] : memref<1x128xf32, #tpu.memory_space<vmem>>, vector<1x128xf32>
    %4 = vector.extract_strided_slice %0 {offsets = [0, 0], sizes = [8, 1], strides = [1, 1]} : vector<8x2xf32> to vector<8x1xf32>
    %5 = vector.extract_strided_slice %2 {offsets = [0, 0], sizes = [1, 128], strides = [1, 1]} : vector<2x128xf32> to vector<1x128xf32>
    %6 = vector.broadcast %4 : vector<8x1xf32> to vector<8x128xf32>
    %7 = vector.broadcast %5 : vector<1x128xf32> to vector<8x128xf32>
    %8 = arith.mulf %6, %7 : vector<8x128xf32>
    %9 = vector.broadcast %3 : vector<1x128xf32> to vector<8x128xf32>
    %10 = arith.addf %9, %8 : vector<8x128xf32>
    %11 = vector.extract_strided_slice %0 {offsets = [0, 1], sizes = [8, 1], strides = [1, 1]} : vector<8x2xf32> to vector<8x1xf32>
    %12 = vector.extract_strided_slice %2 {offsets = [1, 0], sizes = [1, 128], strides = [1, 1]} : vector<2x128xf32> to vector<1x128xf32>
    %13 = vector.broadcast %11 : vector<8x1xf32> to vector<8x128xf32>
    %14 = vector.broadcast %12 : vector<1x128xf32> to vector<8x128xf32>
    %15 = arith.mulf %13, %14 : vector<8x128xf32>
    %16 = arith.addf %10, %15 : vector<8x128xf32>
    %cst = arith.constant 0.000000e+00 : f32
    %17 = vector.broadcast %cst : f32 to vector<8x128xf32>
    %18 = arith.maximumf %16, %17 : vector<8x128xf32>
    %19 = arith.truncf %18 : vector<8x128xf32> to vector<8x128xbf16>
    %c0_5 = arith.constant 0 : index
    %c0_6 = arith.constant 0 : index
    %20 = vector.load %arg4[%c0_5, %c0_6] : memref<128x128xbf16, #tpu.memory_space<vmem>>, vector<128x128xbf16>
    %cst_7 = arith.constant dense<0.000000e+00> : vector<8x128xf32>
    %21 = tpu.matmul %19, %20, %cst_7 {dimension_numbers = #tpu.dot_dimension_numbers<[1], [0], [0], [1], [0, 0, 1, 1], [], []>} : vector<8x128xbf16>, vector<128x128xbf16>, vector<8x128xf32> -> vector<8x128xf32>
    %c0_8 = arith.constant 0 : index
    %c0_9 = arith.constant 0 : index
    %22 = vector.load %arg5[%c0_8, %c0_9] : memref<1x128xf32, #tpu.memory_space<vmem>>, vector<1x128xf32>
    %23 = vector.broadcast %22 : vector<1x128xf32> to vector<8x128xf32>
    %24 = arith.addf %21, %23 : vector<8x128xf32>
    %cst_10 = arith.constant 0.000000e+00 : f32
    %25 = vector.broadcast %cst_10 : f32 to vector<8x128xf32>
    %26 = arith.maximumf %24, %25 : vector<8x128xf32>
    %27 = arith.truncf %26 : vector<8x128xf32> to vector<8x128xbf16>
    %c0_11 = arith.constant 0 : index
    %c0_12 = arith.constant 0 : index
    %28 = vector.load %arg6[%c0_11, %c0_12] : memref<128x128xbf16, #tpu.memory_space<vmem>>, vector<128x128xbf16>
    %cst_13 = arith.constant dense<0.000000e+00> : vector<8x128xf32>
    %29 = tpu.matmul %27, %28, %cst_13 {dimension_numbers = #tpu.dot_dimension_numbers<[1], [0], [0], [1], [0, 0, 1, 1], [], []>} : vector<8x128xbf16>, vector<128x128xbf16>, vector<8x128xf32> -> vector<8x128xf32>
    %c0_14 = arith.constant 0 : index
    %c0_15 = arith.constant 0 : index
    %30 = vector.load %arg7[%c0_14, %c0_15] : memref<1x128xf32, #tpu.memory_space<vmem>>, vector<1x128xf32>
    %31 = vector.broadcast %30 : vector<1x128xf32> to vector<8x128xf32>
    %32 = arith.addf %29, %31 : vector<8x128xf32>
    %c0_16 = arith.constant 0 : index
    %c0_17 = arith.constant 0 : index
    %33 = vector.load %arg8[%c0_16, %c0_17] : memref<8x128xf32, #tpu.memory_space<vmem>>, vector<8x128xf32>
    tpu.vector_store %arg8[%c0_16, %c0_17], %32 {strides = array<i32>} : memref<8x128xf32, #tpu.memory_space<vmem>>, vector<8x128xf32>,
    return
  }
  func.func @transform_0(%arg0: i32) -> (i32, i32) {
    %c0_i32 = arith.constant 0 : i32
    %c0_i32_0 = arith.constant 0 : i32
    return %arg0, %c0_i32 : i32, i32
  }
  func.func @transform_1(%arg0: i32) -> (i32, i32) {
    %c0_i32 = arith.constant 0 : i32
    %c0_i32_0 = arith.constant 0 : i32
    %c0_i32_1 = arith.constant 0 : i32
    return %c0_i32, %c0_i32_0 : i32, i32
  }
  func.func @transform_2(%arg0: i32) -> (i32, i32) {
    %c0_i32 = arith.constant 0 : i32
    %c0_i32_0 = arith.constant 0 : i32
    %c0_i32_1 = arith.constant 0 : i32
    return %c0_i32, %c0_i32_0 : i32, i32
  }
  func.func @transform_3(%arg0: i32) -> (i32, i32) {
    %c0_i32 = arith.constant 0 : i32
    %c0_i32_0 = arith.constant 0 : i32
    %c0_i32_1 = arith.constant 0 : i32
    return %c0_i32, %c0_i32_0 : i32, i32
  }
  func.func @transform_4(%arg0: i32) -> (i32, i32) {
    %c0_i32 = arith.constant 0 : i32
    %c0_i32_0 = arith.constant 0 : i32
    %c0_i32_1 = arith.constant 0 : i32
    return %c0_i32, %c0_i32_0 : i32, i32
  }
  func.func @transform_5(%arg0: i32) -> (i32, i32) {
    %c0_i32 = arith.constant 0 : i32
    %c0_i32_0 = arith.constant 0 : i32
    %c0_i32_1 = arith.constant 0 : i32
    return %c0_i32, %c0_i32_0 : i32, i32
  }
  func.func @transform_6(%arg0: i32) -> (i32, i32) {
    %c0_i32 = arith.constant 0 : i32
    %c0_i32_0 = arith.constant 0 : i32
    %c0_i32_1 = arith.constant 0 : i32
    return %c0_i32, %c0_i32_0 : i32, i32
  }
  func.func @transform_7(%arg0: i32) -> (i32, i32) {
    %c0_i32 = arith.constant 0 : i32
    %c0_i32_0 = arith.constant 0 : i32
    return %arg0, %c0_i32 : i32, i32
  }
}

</mosaic_0001>

<llo_original>
// kernel: tpu_custom_call.1
$region0: #{tpu_custom_call.1}
  #allocation0 [shape = 'u32[]', space=smem, size = 0x4, offset = 0x4, fixed_abs, tag = 'smem constant byte address 0x4 - core index']
  #allocation1 [shape = 'u32[72,128]{1,0:T(1,128)}', space=vmem, size = 0x9000, scoped, tag = 'internal scratch']
  %s0 = inlined_call_operand.vmem [shape: f32[8,2], index: 0, kind: input, shape index: {}]
  %s1 = inlined_call_operand.vmem [shape: bf16[2,128], index: 1, kind: input, shape index: {}]
  %s2 = inlined_call_operand.vmem [shape: f32[1,128], index: 2, kind: input, shape index: {}]
  %s3 = inlined_call_operand.hbm [shape: bf16[128,128], index: 3, kind: input, shape index: {}]
  %s4 = inlined_call_operand.vmem [shape: f32[1,128], index: 4, kind: input, shape index: {}]
  %s5 = inlined_call_operand.hbm [shape: bf16[128,128], index: 5, kind: input, shape index: {}]
  %s6 = inlined_call_operand.vmem [shape: f32[1,128], index: 6, kind: input, shape index: {}]
  %s7 = inlined_call_operand.hbm [shape: f32[8,128], index: 7, kind: output, shape index: {}]
  %s8 = sld [smem:[#allocation0]]
  $region46: #{tpu_custom_call.1} parent=0
    _
  %s10 = ssub.s32 1, %s8
  %s11 = scalar_select 0, %s10, %s8
  $region1: #{tpu_custom_call.1} parent=0
    #allocation2 [shape = 'u8[32768]{0}', space=vmem, size = 0x8000, scoped, tag = 'input window, operand 3, single buffered']
    #allocation3 [shape = 's32[1]{0}', space=sflag, size = 0x4, scoped, tag = 'scoped memory for tpu_custom_call.1']
    #allocation4 [shape = 's32[1]{0}', space=sflag, size = 0x4, scoped, tag = 'scoped memory for tpu_custom_call.1']
    #allocation5 [shape = 'u8[32768]{0}', space=vmem, size = 0x8000, scoped, tag = 'input window, operand 5, single buffered']
    #allocation6 [shape = 's32[1]{0}', space=sflag, size = 0x4, scoped, tag = 'scoped memory for tpu_custom_call.1']
    #allocation7 [shape = 'u8[4096]{0}', space=vmem, size = 0x1000, scoped, tag = 'output window, operand 0, single buffered']
    %12 = vsyncpa [#allocation3], 0
    %13 = vsyncpa [#allocation6], 0
    %14 = vsyncpa [#allocation4], 0
    // Predicated region
    $region2: #{tpu_custom_call.1} parent=1 // pred_check
      _
    $region3: #{tpu_custom_call.1} parent=1 // pred_check_branch
      %16 = sbr.rel (0) target = $region5
    $region4: #{tpu_custom_call.1} parent=1 // pred_region
      _
    $region5: #{tpu_custom_call.1} parent=1 // pred_fallthru
      _
    // Predicated region
    $region6: #{tpu_custom_call.1} parent=1 // pred_check
      _
    $region7: #{tpu_custom_call.1} parent=1 // pred_check_branch
      %18 = sbr.rel (0) target = $region9
    $region8: #{tpu_custom_call.1} parent=1 // pred_region
      _
    $region9: #{tpu_custom_call.1} parent=1 // pred_fallthru
      _
    // Predicated region
    $region10: #{tpu_custom_call.1} parent=1 // pred_check
      _
    $region11: #{tpu_custom_call.1} parent=1 // pred_check_branch
      %20 = sbr.rel (0) target = $region13
    $region12: #{tpu_custom_call.1} parent=1 // pred_region
      _
    $region13: #{tpu_custom_call.1} parent=1 // pred_fallthru
      _
    // Predicated region
    $region14: #{tpu_custom_call.1} parent=1 // pred_check
      _
    $region15: #{tpu_custom_call.1} parent=1 // pred_check_branch
      %22 = sbr.rel (0) target = $region17
    $region16: #{tpu_custom_call.1} parent=1 // pred_region
      %24 = vsyncadd [#allocation3], 0
      %s25 = sshll.u32 %s3, 4
      %s26 = int_to_ptr.hbm [resolvable:$true] %s25
      %s27 = sshll.u32 [#allocation2], 4
      %s28 = int_to_ptr.vmem [resolvable:$true] %s27
      %33 = dma.hbm_to_vmem [thread:$0]  %s26, 1024, %s28, [#allocation3], 64, 64, 4
    $region17: #{tpu_custom_call.1} parent=1 // pred_fallthru
      _
    // Predicated region
    $region18: #{tpu_custom_call.1} parent=1 // pred_check
      _
    $region19: #{tpu_custom_call.1} parent=1 // pred_check_branch
      %35 = sbr.rel (0) target = $region21
    $region20: #{tpu_custom_call.1} parent=1 // pred_region
      _
    $region21: #{tpu_custom_call.1} parent=1 // pred_fallthru
      _
    // Predicated region
    $region22: #{tpu_custom_call.1} parent=1 // pred_check
      _
    $region23: #{tpu_custom_call.1} parent=1 // pred_check_branch
      %37 = sbr.rel (0) target = $region25
    $region24: #{tpu_custom_call.1} parent=1 // pred_region
      %39 = vsyncadd [#allocation6], 0
      %s40 = sshll.u32 %s5, 4
      %s41 = int_to_ptr.hbm [resolvable:$true] %s40
      %s42 = sshll.u32 [#allocation5], 4
      %s43 = int_to_ptr.vmem [resolvable:$true] %s42
      %48 = dma.hbm_to_vmem [thread:$0]  %s41, 1024, %s43, [#allocation6], 64, 64, 4
    $region25: #{tpu_custom_call.1} parent=1 // pred_fallthru
      _
    // Predicated region
    $region26: #{tpu_custom_call.1} parent=1 // pred_check
      _
    $region27: #{tpu_custom_call.1} parent=1 // pred_check_branch
      %50 = sbr.rel (0) target = $region29
    $region28: #{tpu_custom_call.1} parent=1 // pred_region
      _
    $region29: #{tpu_custom_call.1} parent=1 // pred_fallthru
      _
    // Predicated region
    $region30: #{tpu_custom_call.1} parent=1 // pred_check
      _
    $region31: #{tpu_custom_call.1} parent=1 // pred_check_branch
      %52 = sbr.rel (0) target = $region33
    $region32: #{tpu_custom_call.1} parent=1 // pred_region
      %54 = dma.done [#allocation3], 1024
    $region33: #{tpu_custom_call.1} parent=1 // pred_fallthru
      _
    // Predicated region
    $region34: #{tpu_custom_call.1} parent=1 // pred_check
      _
    $region35: #{tpu_custom_call.1} parent=1 // pred_check_branch
      %56 = sbr.rel (0) target = $region37
    $region36: #{tpu_custom_call.1} parent=1 // pred_region
      %58 = dma.done [#allocation6], 1024
    $region37: #{tpu_custom_call.1} parent=1 // pred_fallthru
      _
    %v59 = vld [vmem:[%s0] sm:$0xff]
    %v60 = vld [vmem:[%s1] sm:$0x1]
    %v61 = vunpack.c.l.bf16 %v60
    %v62 = vld [vmem:[%s2] sm:$0x1]
    %64 = vset.pattern.permute.xlu0 0
    %65 = vperm.xlu0 %64, %v59
    %v66 = vpop.permute.xlu0 %65
    %v68 = vperm.slane %v61, 0
    %v69 = vmul.f32 %v66, %v68
    %v71 = vperm.slane %v62, 0
    %v73 = vadd.f32 %v71, %v69
    %74 = vset.pattern.permute.xlu0 1
    %75 = vperm.xlu0 %74, %v59
    %v76 = vpop.permute.xlu0 %75
    %v78 = vperm.slane %v61, 1
    %v79 = vmul.f32 %v76, %v78
    %v80 = vadd.f32 %v73, %v79
    %v81 = vmax.f32 %v80, 0.0
    %v82 = vpack.c.bf16 %v81, %v81
    %v83 = vld [vmem:[#allocation2] sm:$0xf]
    %v84 = vld [vmem:[#allocation2 + $0x4] sm:$0xf]
    %v85 = vld [vmem:[#allocation2 + $0x8] sm:$0xf]
    %v86 = vld [vmem:[#allocation2 + $0xc] sm:$0xf]
    %v87 = vld [vmem:[#allocation2 + $0x10] sm:$0xf]
    %v88 = vld [vmem:[#allocation2 + $0x14] sm:$0xf]
    %v89 = vld [vmem:[#allocation2 + $0x18] sm:$0xf]
    %v90 = vld [vmem:[#allocation2 + $0x1c] sm:$0xf]
    %v91 = vld [vmem:[#allocation2 + $0x20] sm:$0xf]
    %v92 = vld [vmem:[#allocation2 + $0x24] sm:$0xf]
    %v93 = vld [vmem:[#allocation2 + $0x28] sm:$0xf]
    %v94 = vld [vmem:[#allocation2 + $0x2c] sm:$0xf]
    %v95 = vld [vmem:[#allocation2 + $0x30] sm:$0xf]
    %v96 = vld [vmem:[#allocation2 + $0x34] sm:$0xf]
    %v97 = vld [vmem:[#allocation2 + $0x38] sm:$0xf]
    %v98 = vld [vmem:[#allocation2 + $0x3c] sm:$0xf]
    %v99 = vld [vmem:[%s4] sm:$0x1]
    %v101 = vperm.slane %v99, 0
    %v119 = vunpack.c.l.b16 %v83
    %v120 = vunpack.c.l.b16 %v84
    %v121 = vunpack.c.l.b16 %v85
    %v122 = vunpack.c.l.b16 %v86
    %v123 = vunpack.c.l.b16 %v87
    %v124 = vunpack.c.l.b16 %v88
    %v125 = vunpack.c.l.b16 %v89
    %v126 = vunpack.c.l.b16 %v90
    %v127 = vunpack.c.l.b16 %v91
    %v128 = vunpack.c.l.b16 %v92
    %v129 = vunpack.c.l.b16 %v93
    %v130 = vunpack.c.l.b16 %v94
    %v131 = vunpack.c.l.b16 %v95
    %v132 = vunpack.c.l.b16 %v96
    %v133 = vunpack.c.l.b16 %v97
    %v134 = vunpack.c.l.b16 %v98
    %v135 = vpack.c.b16 %v120, %v119
    %v136 = vpack.c.b16 %v122, %v121
    %v137 = vpack.c.b16 %v124, %v123
    %v138 = vpack.c.b16 %v126, %v125
    %v139 = vpack.c.b16 %v128, %v127
    %v140 = vpack.c.b16 %v130, %v129
    %v141 = vpack.c.b16 %v132, %v131
    %v142 = vpack.c.b16 %v134, %v133
    %151 = vmatpush.bf16.msra.mxu0 %v142
    %152 = vmatpush.bf16.msra.mxu0 %v141
    %153 = vmatpush.bf16.msra.mxu0 %v140
    %154 = vmatpush.bf16.msra.mxu0 %v139
    %155 = vmatpush.bf16.msra.mxu0 %v138
    %156 = vmatpush.bf16.msra.mxu0 %v137
    %157 = vmatpush.bf16.msra.mxu0 %v136
    %158 = vmatpush.bf16.msra.mxu0 %v135
    %159 = vmatmul.bf16.gmra.mxu0 %v82
    %v160 = vpop.f32.mrf.mxu0
    %v161 = vadd.f32 %v101, %v160
    %v162 = vpop.f32.mrf.mxu0
    %163 = vdwg.mxu0
    %v164 = vmax.f32 %v161, 0.0
    %v165 = vpack.c.bf16 %v164, %v164
    %v166 = vld [vmem:[#allocation5] sm:$0xf]
    %v167 = vld [vmem:[#allocation5 + $0x4] sm:$0xf]
    %v168 = vld [vmem:[#allocation5 + $0x8] sm:$0xf]
    %v169 = vld [vmem:[#allocation5 + $0xc] sm:$0xf]
    %v170 = vld [vmem:[#allocation5 + $0x10] sm:$0xf]
    %v171 = vld [vmem:[#allocation5 + $0x14] sm:$0xf]
    %v172 = vld [vmem:[#allocation5 + $0x18] sm:$0xf]
    %v173 = vld [vmem:[#allocation5 + $0x1c] sm:$0xf]
    %v174 = vld [vmem:[#allocation5 + $0x20] sm:$0xf]
    %v175 = vld [vmem:[#allocation5 + $0x24] sm:$0xf]
    %v176 = vld [vmem:[#allocation5 + $0x28] sm:$0xf]
    %v177 = vld [vmem:[#allocation5 + $0x2c] sm:$0xf]
    %v178 = vld [vmem:[#allocation5 + $0x30] sm:$0xf]
    %v179 = vld [vmem:[#allocation5 + $0x34] sm:$0xf]
    %v180 = vld [vmem:[#allocation5 + $0x38] sm:$0xf]
    %v181 = vld [vmem:[#allocation5 + $0x3c] sm:$0xf]
    %v182 = vld [vmem:[%s6] sm:$0x1]
    %v184 = vperm.slane %v182, 0
    %v202 = vunpack.c.l.b16 %v166
    %v203 = vunpack.c.l.b16 %v167
    %v204 = vunpack.c.l.b16 %v168
    %v205 = vunpack.c.l.b16 %v169
    %v206 = vunpack.c.l.b16 %v170
    %v207 = vunpack.c.l.b16 %v171
    %v208 = vunpack.c.l.b16 %v172
    %v209 = vunpack.c.l.b16 %v173
    %v210 = vunpack.c.l.b16 %v174
    %v211 = vunpack.c.l.b16 %v175
    %v212 = vunpack.c.l.b16 %v176
    %v213 = vunpack.c.l.b16 %v177
    %v214 = vunpack.c.l.b16 %v178
    %v215 = vunpack.c.l.b16 %v179
    %v216 = vunpack.c.l.b16 %v180
    %v217 = vunpack.c.l.b16 %v181
    %v218 = vpack.c.b16 %v203, %v202
    %v219 = vpack.c.b16 %v205, %v204
    %v220 = vpack.c.b16 %v207, %v206
    %v221 = vpack.c.b16 %v209, %v208
    %v222 = vpack.c.b16 %v211, %v210
    %v223 = vpack.c.b16 %v213, %v212
    %v224 = vpack.c.b16 %v215, %v214
    %v225 = vpack.c.b16 %v217, %v216
    %234 = vmatpush.bf16.msra.mxu0 %v225
    %235 = vmatpush.bf16.msra.mxu0 %v224
    %236 = vmatpush.bf16.msra.mxu0 %v223
    %237 = vmatpush.bf16.msra.mxu0 %v222
    %238 = vmatpush.bf16.msra.mxu0 %v221
    %239 = vmatpush.bf16.msra.mxu0 %v220
    %240 = vmatpush.bf16.msra.mxu0 %v219
    %241 = vmatpush.bf16.msra.mxu0 %v218
    %242 = vmatmul.bf16.gmra.mxu0 %v165
    %v243 = vpop.f32.mrf.mxu0
    %v244 = vadd.f32 %v184, %v243
    %v245 = vpop.f32.mrf.mxu0
    %246 = vdwg.mxu0
    %247 = vst [vmem:[#allocation7] sm:$0xff] %v244
    // Predicated region
    $region38: #{tpu_custom_call.1} parent=1 // pred_check
      _
    $region39: #{tpu_custom_call.1} parent=1 // pred_check_branch
      %249 = sbr.rel (0) target = $region41
    $region40: #{tpu_custom_call.1} parent=1 // pred_region
      %251 = vsyncadd [#allocation4], 0
      %s253 = sshll.u32 [#allocation7], 4
      %s254 = int_to_ptr.vmem [resolvable:$true] %s253
      %s255 = sshll.u32 %s7, 4
      %s256 = int_to_ptr.hbm [resolvable:$true] %s255
      %258 = dma.vmem_to_hbm [thread:$0]  %s254, 128, %s256, [#allocation4]
    $region41: #{tpu_custom_call.1} parent=1 // pred_fallthru
      _
    // Predicated region
    $region42: #{tpu_custom_call.1} parent=1 // pred_check
      _
    $region43: #{tpu_custom_call.1} parent=1 // pred_check_branch
      %260 = sbr.rel (0) target = $region45
    $region44: #{tpu_custom_call.1} parent=1 // pred_region
      %262 = dma.done [#allocation4], 128
    $region45: #{tpu_custom_call.1} parent=1 // pred_fallthru
      _
    %263 = vsyncpa [#allocation3], 1
    %264 = vsyncpa [#allocation6], 1
    %265 = vsyncpa [#allocation4], 1

</llo_original>
